<compile_context>
chip_gen: v7x
topology: tpu7x:2x2x1
jax: 0.10.0
libtpu: 0.0.40
codegen_flags: <defaults>
</compile_context>

<pallas_src>
import functools

import jax
import jax.numpy as jnp
from jax.experimental import pallas as pl
from jax.experimental.pallas import tpu as pltpu

IN_FEATURES = 784
H1 = 256
H2 = 64
NUM_CLASSES = 10
OUT_PAD = 128         # lane-dense output width (>= 128 keeps stores unmasked)
NEG_BIG = -1e30       # mask value for padded logit lanes (safe stand-in for -inf)


def _round_up(x, m):
    return ((x + m - 1) // m) * m


def ffn_kernel(x_ref, w1_ref, b1_ref, w2_ref, b2_ref, w3_ref, b3_ref, o_ref):
    # fc1 -> ReLU   (bf16 operands into the MXU, f32 accumulate + elementwise)
    x = x_ref[...].astype(jnp.bfloat16)                              # (TB, 784)
    h1 = jnp.dot(x, w1_ref[...], preferred_element_type=jnp.float32) + b1_ref[...]
    h1 = jnp.maximum(h1, 0.0)

    # fc2 -> ReLU
    h2 = jnp.dot(h1.astype(jnp.bfloat16), w2_ref[...],
                 preferred_element_type=jnp.float32) + b2_ref[...]
    h2 = jnp.maximum(h2, 0.0)

    # fc3 -> ReLU   (spec: Linear(10) -> ReLU -> LogSoftmax)
    h3 = jnp.dot(h2.astype(jnp.bfloat16), w3_ref[...],
                 preferred_element_type=jnp.float32) + b3_ref[...]
    h3 = jnp.maximum(h3, 0.0)                                        # (TB, 128)

    # mask padded logit lanes (10..127) so they do not contribute to softmax
    lane = jax.lax.broadcasted_iota(jnp.int32, h3.shape, dimension=1)
    h3m = jnp.where(lane < NUM_CLASSES, h3, jnp.float32(NEG_BIG))

    # numerically stable log_softmax over the feature axis (all in f32)
    m = jnp.max(h3m, axis=1, keepdims=True)
    shifted = h3m - m
    lse = jnp.log(jnp.sum(jnp.exp(shifted), axis=1, keepdims=True))
    o_ref[...] = (shifted - lse).astype(o_ref.dtype)                 # (TB, 128) bf16


def prepare_params(params):
    """One-time layout fixup: transpose nn.Linear (out,in) weights to (in,out),
    cast weights to bf16, zero-pad fc3's N dim 10->128, biases stay f32 (1,N)."""
    w1, b1, w2, b2, w3, b3 = params
    w1t = w1.T.astype(jnp.bfloat16)                                               # (784, 256)
    w2t = w2.T.astype(jnp.bfloat16)                                               # (256, 64)
    w3t = jnp.pad(w3.T.astype(jnp.float32),
                  ((0, 0), (0, OUT_PAD - NUM_CLASSES))).astype(jnp.bfloat16)      # (64, 128)
    b1r = b1.astype(jnp.float32).reshape(1, H1)
    b2r = b2.astype(jnp.float32).reshape(1, H2)
    b3r = jnp.pad(b3.astype(jnp.float32), (0, OUT_PAD - NUM_CLASSES)).reshape(1, OUT_PAD)
    return (w1t, b1r, w2t, b2r, w3t, b3r)


@functools.partial(jax.jit, static_argnames=("tb",))
def feedforward(x, prepared, tb=2048):
    """x: (B, 1, 28, 28) or (B, 784) float32; prepared = prepare_params(raw_params).
    Returns (B, 10) float32 log-probabilities."""
    w1t, b1r, w2t, b2r, w3t, b3r = prepared
    B = x.shape[0]

    # x.view(B, -1); no feature pad (784 is used as the full-dim block width)
    x2d = x.reshape(B, -1).astype(jnp.float32)

    # rare tiny pad so the batch tile is sublane-aligned (only if B % 8 != 0)
    Beff = _round_up(B, 8)
    if Beff != B:
        x2d = jnp.pad(x2d, ((0, Beff - B), (0, 0)))

    # batch tile: big enough to amortize per-step overhead / hit HBM roofline,
    # >= 2 grid steps for large batches so v7x megacore shards across both TCs.
    TB = min(tb, max(8, _round_up(pl.cdiv(Beff, 2), 8)))
    grid = (pl.cdiv(Beff, TB),)        # ragged last block allowed (writes masked)

    # scoped-VMEM budget for this tile size (double-buffered x/out + resident
    # weights + intermediates + slack), capped under v7x's 64 MiB physical VMEM.
    weight_elems = IN_FEATURES * H1 + H1 * H2 + H2 * OUT_PAD + H1 + H2 + OUT_PAD
    vmem_bytes = (
        2 * TB * IN_FEATURES * 4          # x blocks, f32, double-buffered
        + 2 * TB * OUT_PAD * 2            # out blocks, bf16, double-buffered
        + 2 * weight_elems * 2            # bf16-ish weights/biases, 2 buffers
        + TB * (IN_FEATURES * 2 + H1 * 6 + H2 * 6 + OUT_PAD * 12)  # intermediates
        + (4 << 20)                       # compiler scratch slack
    )
    vmem_limit = min(max(vmem_bytes, 16 << 20), 64 << 20)

    weight_bytes = 2 * weight_elems
    cost = pl.CostEstimate(
        flops=2 * Beff * (IN_FEATURES * H1 + H1 * H2 + H2 * NUM_CLASSES),
        bytes_accessed=Beff * IN_FEATURES * 4 + Beff * OUT_PAD * 2 + weight_bytes,
        transcendentals=Beff * (OUT_PAD + 1),
    )

    out = pl.pallas_call(
        ffn_kernel,
        out_shape=jax.ShapeDtypeStruct((Beff, OUT_PAD), jnp.bfloat16),
        grid=grid,
        in_specs=[
            pl.BlockSpec((TB, IN_FEATURES), lambda i: (i, 0)),   # x: streamed over batch
            pl.BlockSpec((IN_FEATURES, H1), lambda i: (0, 0)),   # weights/biases: resident
            pl.BlockSpec((1, H1), lambda i: (0, 0)),
            pl.BlockSpec((H1, H2), lambda i: (0, 0)),
            pl.BlockSpec((1, H2), lambda i: (0, 0)),
            pl.BlockSpec((H2, OUT_PAD), lambda i: (0, 0)),
            pl.BlockSpec((1, OUT_PAD), lambda i: (0, 0)),
        ],
        out_specs=pl.BlockSpec((TB, OUT_PAD), lambda i: (i, 0)),
        compiler_params=pltpu.CompilerParams(
            dimension_semantics=("parallel",),
            vmem_limit_bytes=int(vmem_limit),
        ),
        cost_estimate=cost,
    )(x2d, w1t, b1r, w2t, b2r, w3t, b3r)

    return out[:B, :NUM_CLASSES].astype(jnp.float32)


def init_params(key):
    """Deterministic init matching nn.Linear shapes: W (out, in), b (out,)."""
    dims = [(H1, IN_FEATURES), (H2, H1), (NUM_CLASSES, H2)]
    params = []
    for out_d, in_d in dims:
        key, kw, kb = jax.random.split(key, 3)
        bound = 1.0 / (in_d ** 0.5)
        w = jax.random.uniform(kw, (out_d, in_d), jnp.float32, -bound, bound)
        b = jax.random.uniform(kb, (out_d,), jnp.float32, -bound, bound)
        params += [w, b]
    return tuple(params)


def reference(x, params):
    """Pure-JAX f32 reference matching the PyTorch module."""
    w1, b1, w2, b2, w3, b3 = params
    h = x.reshape(x.shape[0], -1).astype(jnp.float32)
    h = jnp.maximum(h @ w1.T + b1, 0.0)
    h = jnp.maximum(h @ w2.T + b2, 0.0)
    h = jnp.maximum(h @ w3.T + b3, 0.0)
    return jax.nn.log_softmax(h, axis=1)


if __name__ == "__main__":
    key = jax.random.PRNGKey(0)
    kx, kp = jax.random.split(key)

    B = 8
    x = jax.random.normal(kx, (B, 1, 28, 28), jnp.float32)   # MNIST-like input
    params = init_params(kp)
    prepared = prepare_params(params)

    out = feedforward(x, prepared)
    out = jax.block_until_ready(out)

    assert out.shape == (B, NUM_CLASSES)
    # sanity: rows sum (in prob space) to ~1 and match the pure-JAX f32 reference
    # (tolerances loosened for bf16 matmul operands / bf16 output store).
    row_sums = jnp.sum(jnp.exp(out), axis=1)
    assert jnp.allclose(row_sums, 1.0, atol=3e-2), row_sums
    ref = reference(x, params)
    assert jnp.allclose(out, ref, atol=5e-2, rtol=5e-2), jnp.max(jnp.abs(out - ref))

    print("KERNEL_OK")
</pallas_src>

<mosaic_0001>
module attributes {stable_mosaic.version = 11 : i64} {
  func.func @ffn_kernel(%arg0: i32, %arg1: memref<8x784xf32, #tpu.memory_space<vmem>>, %arg2: memref<784x256xbf16, #tpu.memory_space<vmem>>, %arg3: memref<1x256xf32, #tpu.memory_space<vmem>>, %arg4: memref<256x64xbf16, #tpu.memory_space<vmem>>, %arg5: memref<1x64xf32, #tpu.memory_space<vmem>>, %arg6: memref<64x128xbf16, #tpu.memory_space<vmem>>, %arg7: memref<1x128xf32, #tpu.memory_space<vmem>>, %arg8: memref<8x128xbf16, #tpu.memory_space<vmem>>) attributes {dimension_semantics = [#tpu.dimension_semantics<parallel>], iteration_bounds = array<i64: 1>, scalar_prefetch = 0 : i64, scratch_operands = 0 : i64, tpu.core_type = #tpu.core_type<tc>, window_params = [{transform_indices = @transform_0, window_bounds = array<i64: 8, 784>}, {pipeline_mode = #tpu.pipeline_mode<synchronous>, transform_indices = @transform_1, window_bounds = array<i64: 784, 256>}, {pipeline_mode = #tpu.pipeline_mode<synchronous>, transform_indices = @transform_2, window_bounds = array<i64: 1, 256>}, {pipeline_mode = #tpu.pipeline_mode<synchronous>, transform_indices = @transform_3, window_bounds = array<i64: 256, 64>}, {pipeline_mode = #tpu.pipeline_mode<synchronous>, transform_indices = @transform_4, window_bounds = array<i64: 1, 64>}, {pipeline_mode = #tpu.pipeline_mode<synchronous>, transform_indices = @transform_5, window_bounds = array<i64: 64, 128>}, {pipeline_mode = #tpu.pipeline_mode<synchronous>, transform_indices = @transform_6, window_bounds = array<i64: 1, 128>}, {transform_indices = @transform_7, window_bounds = array<i64: 8, 128>}]} {
    %c0 = arith.constant 0 : index
    %c0_0 = arith.constant 0 : index
    %0 = vector.load %arg1[%c0, %c0_0] : memref<8x784xf32, #tpu.memory_space<vmem>>, vector<8x784xf32>
    %1 = arith.truncf %0 : vector<8x784xf32> to vector<8x784xbf16>
    %c0_1 = arith.constant 0 : index
    %c0_2 = arith.constant 0 : index
    %2 = vector.load %arg2[%c0_1, %c0_2] : memref<784x256xbf16, #tpu.memory_space<vmem>>, vector<784x256xbf16>
    %cst = arith.constant dense<0.000000e+00> : vector<8x256xf32>
    %3 = tpu.matmul %1, %2, %cst {dimension_numbers = #tpu.dot_dimension_numbers<[1], [0], [0], [1], [0, 0, 1, 1], [], []>} : vector<8x784xbf16>, vector<784x256xbf16>, vector<8x256xf32> -> vector<8x256xf32>
    %c0_3 = arith.constant 0 : index
    %c0_4 = arith.constant 0 : index
    %4 = vector.load %arg3[%c0_3, %c0_4] : memref<1x256xf32, #tpu.memory_space<vmem>>, vector<1x256xf32>
    %5 = vector.broadcast %4 : vector<1x256xf32> to vector<8x256xf32>
    %6 = arith.addf %3, %5 : vector<8x256xf32>
    %cst_5 = arith.constant 0.000000e+00 : f32
    %7 = vector.broadcast %cst_5 : f32 to vector<8x256xf32>
    %8 = arith.maximumf %6, %7 : vector<8x256xf32>
    %9 = arith.truncf %8 : vector<8x256xf32> to vector<8x256xbf16>
    %c0_6 = arith.constant 0 : index
    %c0_7 = arith.constant 0 : index
    %10 = vector.load %arg4[%c0_6, %c0_7] : memref<256x64xbf16, #tpu.memory_space<vmem>>, vector<256x64xbf16>
    %cst_8 = arith.constant dense<0.000000e+00> : vector<8x64xf32>
    %11 = tpu.matmul %9, %10, %cst_8 {dimension_numbers = #tpu.dot_dimension_numbers<[1], [0], [0], [1], [0, 0, 1, 1], [], []>} : vector<8x256xbf16>, vector<256x64xbf16>, vector<8x64xf32> -> vector<8x64xf32>
    %c0_9 = arith.constant 0 : index
    %c0_10 = arith.constant 0 : index
    %12 = vector.load %arg5[%c0_9, %c0_10] : memref<1x64xf32, #tpu.memory_space<vmem>>, vector<1x64xf32>
    %13 = vector.broadcast %12 : vector<1x64xf32> to vector<8x64xf32>
    %14 = arith.addf %11, %13 : vector<8x64xf32>
    %cst_11 = arith.constant 0.000000e+00 : f32
    %15 = vector.broadcast %cst_11 : f32 to vector<8x64xf32>
    %16 = arith.maximumf %14, %15 : vector<8x64xf32>
    %17 = arith.truncf %16 : vector<8x64xf32> to vector<8x64xbf16>
    %c0_12 = arith.constant 0 : index
    %c0_13 = arith.constant 0 : index
    %18 = vector.load %arg6[%c0_12, %c0_13] : memref<64x128xbf16, #tpu.memory_space<vmem>>, vector<64x128xbf16>
    %cst_14 = arith.constant dense<0.000000e+00> : vector<8x128xf32>
    %19 = tpu.matmul %17, %18, %cst_14 {dimension_numbers = #tpu.dot_dimension_numbers<[1], [0], [0], [1], [0, 0, 1, 1], [], []>} : vector<8x64xbf16>, vector<64x128xbf16>, vector<8x128xf32> -> vector<8x128xf32>
    %c0_15 = arith.constant 0 : index
    %c0_16 = arith.constant 0 : index
    %20 = vector.load %arg7[%c0_15, %c0_16] : memref<1x128xf32, #tpu.memory_space<vmem>>, vector<1x128xf32>
    %21 = vector.broadcast %20 : vector<1x128xf32> to vector<8x128xf32>
    %22 = arith.addf %19, %21 : vector<8x128xf32>
    %cst_17 = arith.constant 0.000000e+00 : f32
    %23 = vector.broadcast %cst_17 : f32 to vector<8x128xf32>
    %24 = arith.maximumf %22, %23 : vector<8x128xf32>
    %25 = tpu.iota {dimensions = array<i32: 1>} : vector<8x128xi32>
    %c10_i32 = arith.constant 10 : i32
    %26 = vector.broadcast %c10_i32 : i32 to vector<8x128xi32>
    %27 = arith.cmpi slt, %25, %26 : vector<8x128xi32>
    %cst_18 = arith.constant -1.000000e+30 : f32
    %28 = vector.broadcast %cst_18 : f32 to vector<8x128xf32>
    %29 = arith.select %27, %24, %28 : vector<8x128xi1>, vector<8x128xf32>
    %cst_19 = arith.constant dense<0xFF800000> : vector<8xf32>
    %30 = vector.multi_reduction <maximumf>, %29, %cst_19 [1] : vector<8x128xf32> to vector<8xf32>
    %31 = vector.shape_cast %30 : vector<8xf32> to vector<8x1xf32>
    %32 = vector.broadcast %31 : vector<8x1xf32> to vector<8x128xf32>
    %33 = arith.subf %29, %32 : vector<8x128xf32>
    %34 = math.exp %33 : vector<8x128xf32>
    %cst_20 = arith.constant dense<0.000000e+00> : vector<8xf32>
    %35 = vector.multi_reduction <add>, %34, %cst_20 [1] : vector<8x128xf32> to vector<8xf32>
    %36 = vector.shape_cast %35 : vector<8xf32> to vector<8x1xf32>
    %37 = math.log %36 : vector<8x1xf32>
    %38 = vector.broadcast %37 : vector<8x1xf32> to vector<8x128xf32>
    %39 = arith.subf %33, %38 : vector<8x128xf32>
    %40 = arith.truncf %39 : vector<8x128xf32> to vector<8x128xbf16>
    %c0_21 = arith.constant 0 : index
    %c0_22 = arith.constant 0 : index
    %41 = vector.load %arg8[%c0_21, %c0_22] : memref<8x128xbf16, #tpu.memory_space<vmem>>, vector<8x128xbf16>
    tpu.vector_store %arg8[%c0_21, %c0_22], %40 {strides = array<i32>} : memref<8x128xbf16, #tpu.memory_space<vmem>>, vector<8x128xbf16>,
    return
  }
  func.func @transform_0(%arg0: i32) -> (i32, i32) {
    %c0_i32 = arith.constant 0 : i32
    %c0_i32_0 = arith.constant 0 : i32
    return %arg0, %c0_i32 : i32, i32
  }
  func.func @transform_1(%arg0: i32) -> (i32, i32) {
    %c0_i32 = arith.constant 0 : i32
    %c0_i32_0 = arith.constant 0 : i32
    %c0_i32_1 = arith.constant 0 : i32
    return %c0_i32, %c0_i32_0 : i32, i32
  }
  func.func @transform_2(%arg0: i32) -> (i32, i32) {
    %c0_i32 = arith.constant 0 : i32
    %c0_i32_0 = arith.constant 0 : i32
    %c0_i32_1 = arith.constant 0 : i32
    return %c0_i32, %c0_i32_0 : i32, i32
  }
  func.func @transform_3(%arg0: i32) -> (i32, i32) {
    %c0_i32 = arith.constant 0 : i32
    %c0_i32_0 = arith.constant 0 : i32
    %c0_i32_1 = arith.constant 0 : i32
    return %c0_i32, %c0_i32_0 : i32, i32
  }
  func.func @transform_4(%arg0: i32) -> (i32, i32) {
    %c0_i32 = arith.constant 0 : i32
    %c0_i32_0 = arith.constant 0 : i32
    %c0_i32_1 = arith.constant 0 : i32
    return %c0_i32, %c0_i32_0 : i32, i32
  }
  func.func @transform_5(%arg0: i32) -> (i32, i32) {
    %c0_i32 = arith.constant 0 : i32
    %c0_i32_0 = arith.constant 0 : i32
    %c0_i32_1 = arith.constant 0 : i32
    return %c0_i32, %c0_i32_0 : i32, i32
  }
  func.func @transform_6(%arg0: i32) -> (i32, i32) {
    %c0_i32 = arith.constant 0 : i32
    %c0_i32_0 = arith.constant 0 : i32
    %c0_i32_1 = arith.constant 0 : i32
    return %c0_i32, %c0_i32_0 : i32, i32
  }
  func.func @transform_7(%arg0: i32) -> (i32, i32) {
    %c0_i32 = arith.constant 0 : i32
    %c0_i32_0 = arith.constant 0 : i32
    return %arg0, %c0_i32 : i32, i32
  }
}

</mosaic_0001>

<llo_original>
// kernel: feedforward.1
$region0: #{feedforward.1}
  #allocation0 [shape = 'u32[]', space=smem, size = 0x4, offset = 0x4, fixed_abs, tag = 'smem constant byte address 0x4 - core index']
  #allocation1 [shape = 'u32[144,128]{1,0:T(1,128)}', space=vmem, size = 0x12000, scoped, tag = 'internal scratch']
  %s0 = inlined_call_operand.vmem [shape: f32[8,784], index: 0, kind: input, shape index: {}]
  %s1 = inlined_call_operand.vmem [shape: bf16[784,256], index: 1, kind: input, shape index: {}]
  %s2 = inlined_call_operand.vmem [shape: f32[1,256], index: 2, kind: input, shape index: {}]
  %s3 = inlined_call_operand.vmem [shape: bf16[256,64], index: 3, kind: input, shape index: {}]
  %s4 = inlined_call_operand.vmem [shape: f32[1,64], index: 4, kind: input, shape index: {}]
  %s5 = inlined_call_operand.vmem [shape: bf16[64,128], index: 5, kind: input, shape index: {}]
  %s6 = inlined_call_operand.vmem [shape: f32[1,128], index: 6, kind: input, shape index: {}]
  %s7 = inlined_call_operand.vmem [shape: bf16[8,128], index: 7, kind: output, shape index: {}]
  %s8 = sld [smem:[#allocation0]]
  $region38: #{feedforward.1} parent=0
    _
  %s10 = ssub.s32 1, %s8
  %s11 = scalar_select 0, %s10, %s8
  // Predicated region
  $region2: #{feedforward.1} parent=0 // pred_check
    _
  $region3: #{feedforward.1} parent=0 // pred_check_branch
    %13 = sbr.rel (0) target = $region5
  $region4: #{feedforward.1} parent=0 // pred_region
    _
  $region5: #{feedforward.1} parent=0 // pred_fallthru
    _
  // Predicated region
  $region6: #{feedforward.1} parent=0 // pred_check
    _
  $region7: #{feedforward.1} parent=0 // pred_check_branch
    %15 = sbr.rel (0) target = $region9
  $region8: #{feedforward.1} parent=0 // pred_region
    _
  $region9: #{feedforward.1} parent=0 // pred_fallthru
    _
  // Predicated region
  $region10: #{feedforward.1} parent=0 // pred_check
    _
  $region11: #{feedforward.1} parent=0 // pred_check_branch
    %17 = sbr.rel (0) target = $region13
  $region12: #{feedforward.1} parent=0 // pred_region
    _
  $region13: #{feedforward.1} parent=0 // pred_fallthru
    _
  // Predicated region
  $region14: #{feedforward.1} parent=0 // pred_check
    _
  $region15: #{feedforward.1} parent=0 // pred_check_branch
    %19 = sbr.rel (0) target = $region17
  $region16: #{feedforward.1} parent=0 // pred_region
    _
  $region17: #{feedforward.1} parent=0 // pred_fallthru
    _
  // Predicated region
  $region18: #{feedforward.1} parent=0 // pred_check
    _
  $region19: #{feedforward.1} parent=0 // pred_check_branch
    %21 = sbr.rel (0) target = $region21
  $region20: #{feedforward.1} parent=0 // pred_region
    _
  $region21: #{feedforward.1} parent=0 // pred_fallthru
    _
  // Predicated region
  $region22: #{feedforward.1} parent=0 // pred_check
    _
  $region23: #{feedforward.1} parent=0 // pred_check_branch
    %23 = sbr.rel (0) target = $region25
  $region24: #{feedforward.1} parent=0 // pred_region
    _
  $region25: #{feedforward.1} parent=0 // pred_fallthru
    _
  // Predicated region
  $region26: #{feedforward.1} parent=0 // pred_check
    _
  $region27: #{feedforward.1} parent=0 // pred_check_branch
    %25 = sbr.rel (0) target = $region29
  $region28: #{feedforward.1} parent=0 // pred_region
    _
  $region29: #{feedforward.1} parent=0 // pred_fallthru
    _
  %v27 = vld [vmem:[%s0] sm:$0xff]
  %v28 = vld [vmem:[%s0 + $0x8] sm:$0xff]
  %v29 = vld [vmem:[%s0 + $0x10] sm:$0xff]
  %v30 = vld [vmem:[%s0 + $0x18] sm:$0xff]
  %v31 = vld [vmem:[%s0 + $0x20] sm:$0xff]
  %v32 = vld [vmem:[%s0 + $0x28] sm:$0xff]
  %v33 = vld [vmem:[%s0 + $0x30] sm:$0xff]
  %v34 = vpack.c.bf16 %v27, %v27
  %v35 = vpack.c.bf16 %v28, %v28
  %v36 = vpack.c.bf16 %v29, %v29
  %v37 = vpack.c.bf16 %v30, %v30
  %v38 = vpack.c.bf16 %v31, %v31
  %v39 = vpack.c.bf16 %v32, %v32
  %v40 = vpack.c.bf16 %v33, %v33
  %v41 = vld [vmem:[%s1] sm:$0xff]
  %v42 = vld [vmem:[%s1 + $0x8] sm:$0xff]
  %v43 = vld [vmem:[%s1 + $0x10] sm:$0xff]
  %v44 = vld [vmem:[%s1 + $0x18] sm:$0xff]
  %v45 = vld [vmem:[%s1 + $0x20] sm:$0xff]
  %v46 = vld [vmem:[%s1 + $0x28] sm:$0xff]
  %v47 = vld [vmem:[%s1 + $0x30] sm:$0xff]
  %v48 = vld [vmem:[%s1 + $0x38] sm:$0xff]
  %v49 = vld [vmem:[%s1 + $0x40] sm:$0xff]
  %v50 = vld [vmem:[%s1 + $0x48] sm:$0xff]
  %v51 = vld [vmem:[%s1 + $0x50] sm:$0xff]
  %v52 = vld [vmem:[%s1 + $0x58] sm:$0xff]
  %v53 = vld [vmem:[%s1 + $0x60] sm:$0xff]
  %v54 = vld [vmem:[%s1 + $0x68] sm:$0xff]
  %v55 = vld [vmem:[%s1 + $0x70] sm:$0xff]
  %v56 = vld [vmem:[%s1 + $0x78] sm:$0xff]
  %v57 = vld [vmem:[%s1 + $0x80] sm:$0xff]
  %v58 = vld [vmem:[%s1 + $0x88] sm:$0xff]
  %v59 = vld [vmem:[%s1 + $0x90] sm:$0xff]
  %v60 = vld [vmem:[%s1 + $0x98] sm:$0xff]
  %v61 = vld [vmem:[%s1 + $0xa0] sm:$0xff]
  %v62 = vld [vmem:[%s1 + $0xa8] sm:$0xff]
  %v63 = vld [vmem:[%s1 + $0xb0] sm:$0xff]
  %v64 = vld [vmem:[%s1 + $0xb8] sm:$0xff]
  %v65 = vld [vmem:[%s1 + $0xc0] sm:$0xff]
  %v66 = vld [vmem:[%s1 + $0xc8] sm:$0xff]
  %v67 = vld [vmem:[%s1 + $0xd0] sm:$0xff]
  %v68 = vld [vmem:[%s1 + $0xd8] sm:$0xff]
  %v69 = vld [vmem:[%s1 + $0xe0] sm:$0xff]
  %v70 = vld [vmem:[%s1 + $0xe8] sm:$0xff]
  %v71 = vld [vmem:[%s1 + $0xf0] sm:$0xff]
  %v72 = vld [vmem:[%s1 + $0xf8] sm:$0xff]
  %v73 = vld [vmem:[%s1 + $0x100] sm:$0xff]
  %v74 = vld [vmem:[%s1 + $0x108] sm:$0xff]
  %v75 = vld [vmem:[%s1 + $0x110] sm:$0xff]
  %v76 = vld [vmem:[%s1 + $0x118] sm:$0xff]
  %v77 = vld [vmem:[%s1 + $0x120] sm:$0xff]
  %v78 = vld [vmem:[%s1 + $0x128] sm:$0xff]
  %v79 = vld [vmem:[%s1 + $0x130] sm:$0xff]
  %v80 = vld [vmem:[%s1 + $0x138] sm:$0xff]
  %v81 = vld [vmem:[%s1 + $0x140] sm:$0xff]
  %v82 = vld [vmem:[%s1 + $0x148] sm:$0xff]
  %v83 = vld [vmem:[%s1 + $0x150] sm:$0xff]
  %v84 = vld [vmem:[%s1 + $0x158] sm:$0xff]
  %v85 = vld [vmem:[%s1 + $0x160] sm:$0xff]
  %v86 = vld [vmem:[%s1 + $0x168] sm:$0xff]
  %v87 = vld [vmem:[%s1 + $0x170] sm:$0xff]
  %v88 = vld [vmem:[%s1 + $0x178] sm:$0xff]
  %v89 = vld [vmem:[%s1 + $0x180] sm:$0xff]
  %v90 = vld [vmem:[%s1 + $0x188] sm:$0xff]
  %v91 = vld [vmem:[%s1 + $0x190] sm:$0xff]
  %v92 = vld [vmem:[%s1 + $0x198] sm:$0xff]
  %v93 = vld [vmem:[%s1 + $0x1a0] sm:$0xff]
  %v94 = vld [vmem:[%s1 + $0x1a8] sm:$0xff]
  %v95 = vld [vmem:[%s1 + $0x1b0] sm:$0xff]
  %v96 = vld [vmem:[%s1 + $0x1b8] sm:$0xff]
  %v97 = vld [vmem:[%s1 + $0x1c0] sm:$0xff]
  %v98 = vld [vmem:[%s1 + $0x1c8] sm:$0xff]
  %v99 = vld [vmem:[%s1 + $0x1d0] sm:$0xff]
  %v100 = vld [vmem:[%s1 + $0x1d8] sm:$0xff]
  %v101 = vld [vmem:[%s1 + $0x1e0] sm:$0xff]
  %v102 = vld [vmem:[%s1 + $0x1e8] sm:$0xff]
  %v103 = vld [vmem:[%s1 + $0x1f0] sm:$0xff]
  %v104 = vld [vmem:[%s1 + $0x1f8] sm:$0xff]
  %v105 = vld [vmem:[%s1 + $0x200] sm:$0xff]
  %v106 = vld [vmem:[%s1 + $0x208] sm:$0xff]
  %v107 = vld [vmem:[%s1 + $0x210] sm:$0xff]
  %v108 = vld [vmem:[%s1 + $0x218] sm:$0xff]
  %v109 = vld [vmem:[%s1 + $0x220] sm:$0xff]
  %v110 = vld [vmem:[%s1 + $0x228] sm:$0xff]
  %v111 = vld [vmem:[%s1 + $0x230] sm:$0xff]
  %v112 = vld [vmem:[%s1 + $0x238] sm:$0xff]
  %v113 = vld [vmem:[%s1 + $0x240] sm:$0xff]
  %v114 = vld [vmem:[%s1 + $0x248] sm:$0xff]
  %v115 = vld [vmem:[%s1 + $0x250] sm:$0xff]
  %v116 = vld [vmem:[%s1 + $0x258] sm:$0xff]
  %v117 = vld [vmem:[%s1 + $0x260] sm:$0xff]
  %v118 = vld [vmem:[%s1 + $0x268] sm:$0xff]
  %v119 = vld [vmem:[%s1 + $0x270] sm:$0xff]
  %v120 = vld [vmem:[%s1 + $0x278] sm:$0xff]
  %v121 = vld [vmem:[%s1 + $0x280] sm:$0xff]
  %v122 = vld [vmem:[%s1 + $0x288] sm:$0xff]
  %v123 = vld [vmem:[%s1 + $0x290] sm:$0xff]
  %v124 = vld [vmem:[%s1 + $0x298] sm:$0xff]
  %v125 = vld [vmem:[%s1 + $0x2a0] sm:$0xff]
  %v126 = vld [vmem:[%s1 + $0x2a8] sm:$0xff]
  %v127 = vld [vmem:[%s1 + $0x2b0] sm:$0xff]
  %v128 = vld [vmem:[%s1 + $0x2b8] sm:$0xff]
  %v129 = vld [vmem:[%s1 + $0x2c0] sm:$0xff]
  %v130 = vld [vmem:[%s1 + $0x2c8] sm:$0xff]
  %v131 = vld [vmem:[%s1 + $0x2d0] sm:$0xff]
  %v132 = vld [vmem:[%s1 + $0x2d8] sm:$0xff]
  %v133 = vld [vmem:[%s1 + $0x2e0] sm:$0xff]
  %v134 = vld [vmem:[%s1 + $0x2e8] sm:$0xff]
  %v135 = vld [vmem:[%s1 + $0x2f0] sm:$0xff]
  %v136 = vld [vmem:[%s1 + $0x2f8] sm:$0xff]
  %v137 = vld [vmem:[%s1 + $0x300] sm:$0xff]
  %v138 = vld [vmem:[%s1 + $0x308] sm:$0xff]
  %v139 = vld [vmem:[%s2] sm:$0x3]
  %v141 = vlaneseq
  %v142 = vshrl.u32 %v141, 7
  %v143 = vsub.s32 0, %v142
  %v144 = vrot.slane %v139, %v143
  %v145 = vlaneseq
  %v146 = vshrl.u32 %v145, 7
  %v147 = vsub.s32 1, %v146
  %v148 = vrot.slane %v139, %v147
  %v249 = vunpack.c.l.b16 %v41
  %v250 = vunpack.c.h.b16 %v41
  %v251 = vunpack.c.l.b16 %v42
  %v252 = vunpack.c.h.b16 %v42
  %v253 = vunpack.c.l.b16 %v43
  %v254 = vunpack.c.h.b16 %v43
  %v255 = vunpack.c.l.b16 %v44
  %v256 = vunpack.c.h.b16 %v44
  %v257 = vunpack.c.l.b16 %v45
  %v258 = vunpack.c.h.b16 %v45
  %v259 = vunpack.c.l.b16 %v46
  %v260 = vunpack.c.h.b16 %v46
  %v261 = vunpack.c.l.b16 %v47
  %v262 = vunpack.c.h.b16 %v47
  %v263 = vunpack.c.l.b16 %v48
  %v264 = vunpack.c.h.b16 %v48
  %v265 = vunpack.c.l.b16 %v49
  %v266 = vunpack.c.h.b16 %v49
  %v267 = vunpack.c.l.b16 %v50
  %v268 = vunpack.c.h.b16 %v50
  %v269 = vunpack.c.l.b16 %v51
  %v270 = vunpack.c.h.b16 %v51
  %v271 = vunpack.c.l.b16 %v52
  %v272 = vunpack.c.h.b16 %v52
  %v273 = vunpack.c.l.b16 %v53
  %v274 = vunpack.c.h.b16 %v53
  %v275 = vunpack.c.l.b16 %v54
  %v276 = vunpack.c.h.b16 %v54
  %v277 = vunpack.c.l.b16 %v55
  %v278 = vunpack.c.h.b16 %v55
  %v279 = vunpack.c.l.b16 %v56
  %v280 = vunpack.c.h.b16 %v56
  %v281 = vunpack.c.l.b16 %v57
  %v282 = vunpack.c.h.b16 %v57
  %v283 = vunpack.c.l.b16 %v58
  %v284 = vunpack.c.h.b16 %v58
  %v285 = vunpack.c.l.b16 %v59
  %v286 = vunpack.c.h.b16 %v59
  %v287 = vunpack.c.l.b16 %v60
  %v288 = vunpack.c.h.b16 %v60
  %v289 = vunpack.c.l.b16 %v61
  %v290 = vunpack.c.h.b16 %v61
  %v291 = vunpack.c.l.b16 %v62
  %v292 = vunpack.c.h.b16 %v62
  %v293 = vunpack.c.l.b16 %v63
  %v294 = vunpack.c.h.b16 %v63
  %v295 = vunpack.c.l.b16 %v64
  %v296 = vunpack.c.h.b16 %v64
  %v297 = vunpack.c.l.b16 %v65
  %v298 = vunpack.c.h.b16 %v65
  %v299 = vunpack.c.l.b16 %v66
  %v300 = vunpack.c.h.b16 %v66
  %v301 = vunpack.c.l.b16 %v67
  %v302 = vunpack.c.h.b16 %v67
  %v303 = vunpack.c.l.b16 %v68
  %v304 = vunpack.c.h.b16 %v68
  %v305 = vunpack.c.l.b16 %v69
  %v306 = vunpack.c.h.b16 %v69
  %v307 = vunpack.c.l.b16 %v70
  %v308 = vunpack.c.h.b16 %v70
  %v309 = vunpack.c.l.b16 %v71
  %v310 = vunpack.c.h.b16 %v71
  %v311 = vunpack.c.l.b16 %v72
  %v312 = vunpack.c.h.b16 %v72
  %v313 = vunpack.c.l.b16 %v73
  %v314 = vunpack.c.h.b16 %v73
  %v315 = vunpack.c.l.b16 %v74
  %v316 = vunpack.c.h.b16 %v74
  %v317 = vunpack.c.l.b16 %v75
  %v318 = vunpack.c.h.b16 %v75
  %v319 = vunpack.c.l.b16 %v76
  %v320 = vunpack.c.h.b16 %v76
  %v321 = vunpack.c.l.b16 %v77
  %v322 = vunpack.c.h.b16 %v77
  %v323 = vunpack.c.l.b16 %v78
  %v324 = vunpack.c.h.b16 %v78
  %v325 = vunpack.c.l.b16 %v79
  %v326 = vunpack.c.h.b16 %v79
  %v327 = vunpack.c.l.b16 %v80
  %v328 = vunpack.c.h.b16 %v80
  %v329 = vunpack.c.l.b16 %v81
  %v330 = vunpack.c.h.b16 %v81
  %v331 = vunpack.c.l.b16 %v82
  %v332 = vunpack.c.h.b16 %v82
  %v333 = vunpack.c.l.b16 %v83
  %v334 = vunpack.c.h.b16 %v83
  %v335 = vunpack.c.l.b16 %v84
  %v336 = vunpack.c.h.b16 %v84
  %v337 = vunpack.c.l.b16 %v85
  %v338 = vunpack.c.h.b16 %v85
  %v339 = vunpack.c.l.b16 %v86
  %v340 = vunpack.c.h.b16 %v86
  %v341 = vunpack.c.l.b16 %v87
  %v342 = vunpack.c.h.b16 %v87
  %v343 = vunpack.c.l.b16 %v88
  %v344 = vunpack.c.h.b16 %v88
  %v345 = vunpack.c.l.b16 %v89
  %v346 = vunpack.c.h.b16 %v89
  %v347 = vunpack.c.l.b16 %v90
  %v348 = vunpack.c.h.b16 %v90
  %v349 = vunpack.c.l.b16 %v91
  %v350 = vunpack.c.h.b16 %v91
  %v351 = vunpack.c.l.b16 %v92
  %v352 = vunpack.c.h.b16 %v92
  %v353 = vunpack.c.l.b16 %v93
  %v354 = vunpack.c.h.b16 %v93
  %v355 = vunpack.c.l.b16 %v94
  %v356 = vunpack.c.h.b16 %v94
  %v357 = vunpack.c.l.b16 %v95
  %v358 = vunpack.c.h.b16 %v95
  %v359 = vunpack.c.l.b16 %v96
  %v360 = vunpack.c.h.b16 %v96
  %v361 = vunpack.c.l.b16 %v97
  %v362 = vunpack.c.h.b16 %v97
  %v363 = vunpack.c.l.b16 %v98
  %v364 = vunpack.c.h.b16 %v98
  %v365 = vunpack.c.l.b16 %v99
  %v366 = vunpack.c.h.b16 %v99
  %v367 = vunpack.c.l.b16 %v100
  %v368 = vunpack.c.h.b16 %v100
  %v369 = vunpack.c.l.b16 %v101
  %v370 = vunpack.c.h.b16 %v101
  %v371 = vunpack.c.l.b16 %v102
  %v372 = vunpack.c.h.b16 %v102
  %v373 = vunpack.c.l.b16 %v103
  %v374 = vunpack.c.h.b16 %v103
  %v375 = vunpack.c.l.b16 %v104
  %v376 = vunpack.c.h.b16 %v104
  %v377 = vunpack.c.l.b16 %v105
  %v378 = vunpack.c.h.b16 %v105
  %v379 = vunpack.c.l.b16 %v106
  %v380 = vunpack.c.h.b16 %v106
  %v381 = vunpack.c.l.b16 %v107
  %v382 = vunpack.c.h.b16 %v107
  %v383 = vunpack.c.l.b16 %v108
  %v384 = vunpack.c.h.b16 %v108
  %v385 = vunpack.c.l.b16 %v109
  %v386 = vunpack.c.h.b16 %v109
  %v387 = vunpack.c.l.b16 %v110
  %v388 = vunpack.c.h.b16 %v110
  %v389 = vunpack.c.l.b16 %v111
  %v390 = vunpack.c.h.b16 %v111
  %v391 = vunpack.c.l.b16 %v112
  %v392 = vunpack.c.h.b16 %v112
  %v393 = vunpack.c.l.b16 %v113
  %v394 = vunpack.c.h.b16 %v113
  %v395 = vunpack.c.l.b16 %v114
  %v396 = vunpack.c.h.b16 %v114
  %v397 = vunpack.c.l.b16 %v115
  %v398 = vunpack.c.h.b16 %v115
  %v399 = vunpack.c.l.b16 %v116
  %v400 = vunpack.c.h.b16 %v116
  %v401 = vunpack.c.l.b16 %v117
  %v402 = vunpack.c.h.b16 %v117
  %v403 = vunpack.c.l.b16 %v118
  %v404 = vunpack.c.h.b16 %v118
  %v405 = vunpack.c.l.b16 %v119
  %v406 = vunpack.c.h.b16 %v119
  %v407 = vunpack.c.l.b16 %v120
  %v408 = vunpack.c.h.b16 %v120
  %v409 = vunpack.c.l.b16 %v121
  %v410 = vunpack.c.h.b16 %v121
  %v411 = vunpack.c.l.b16 %v122
  %v412 = vunpack.c.h.b16 %v122
  %v413 = vunpack.c.l.b16 %v123
  %v414 = vunpack.c.h.b16 %v123
  %v415 = vunpack.c.l.b16 %v124
  %v416 = vunpack.c.h.b16 %v124
  %v417 = vunpack.c.l.b16 %v125
  %v418 = vunpack.c.h.b16 %v125
  %v419 = vunpack.c.l.b16 %v126
  %v420 = vunpack.c.h.b16 %v126
  %v421 = vunpack.c.l.b16 %v127
  %v422 = vunpack.c.h.b16 %v127
  %v423 = vunpack.c.l.b16 %v128
  %v424 = vunpack.c.h.b16 %v128
  %v425 = vunpack.c.l.b16 %v129
  %v426 = vunpack.c.h.b16 %v129
  %v427 = vunpack.c.l.b16 %v130
  %v428 = vunpack.c.h.b16 %v130
  %v429 = vunpack.c.l.b16 %v131
  %v430 = vunpack.c.h.b16 %v131
  %v431 = vunpack.c.l.b16 %v132
  %v432 = vunpack.c.h.b16 %v132
  %v433 = vunpack.c.l.b16 %v133
  %v434 = vunpack.c.h.b16 %v133
  %v435 = vunpack.c.l.b16 %v134
  %v436 = vunpack.c.h.b16 %v134
  %v437 = vunpack.c.l.b16 %v135
  %v438 = vunpack.c.h.b16 %v135
  %v439 = vunpack.c.l.b16 %v136
  %v440 = vunpack.c.h.b16 %v136
  %v441 = vunpack.c.l.b16 %v137
  %v442 = vunpack.c.h.b16 %v137
  %v443 = vunpack.c.l.b16 %v138
  %v444 = vunpack.c.h.b16 %v138
  %v445 = vpack.c.b16 %v251, %v249
  %v446 = vpack.c.b16 %v252, %v250
  %v447 = vpack.c.b16 %v255, %v253
  %v448 = vpack.c.b16 %v256, %v254
  %v449 = vpack.c.b16 %v259, %v257
  %v450 = vpack.c.b16 %v260, %v258
  %v451 = vpack.c.b16 %v263, %v261
  %v452 = vpack.c.b16 %v264, %v262
  %v453 = vpack.c.b16 %v267, %v265
  %v454 = vpack.c.b16 %v268, %v266
  %v455 = vpack.c.b16 %v271, %v269
  %v456 = vpack.c.b16 %v272, %v270
  %v457 = vpack.c.b16 %v275, %v273
  %v458 = vpack.c.b16 %v276, %v274
  %v459 = vpack.c.b16 %v279, %v277
  %v460 = vpack.c.b16 %v280, %v278
  %v461 = vpack.c.b16 %v283, %v281
  %v462 = vpack.c.b16 %v284, %v282
  %v463 = vpack.c.b16 %v287, %v285
  %v464 = vpack.c.b16 %v288, %v286
  %v465 = vpack.c.b16 %v291, %v289
  %v466 = vpack.c.b16 %v292, %v290
  %v467 = vpack.c.b16 %v295, %v293
  %v468 = vpack.c.b16 %v296, %v294
  %v469 = vpack.c.b16 %v299, %v297
  %v470 = vpack.c.b16 %v300, %v298
  %v471 = vpack.c.b16 %v303, %v301
  %v472 = vpack.c.b16 %v304, %v302
  %v473 = vpack.c.b16 %v307, %v305
  %v474 = vpack.c.b16 %v308, %v306
  %v475 = vpack.c.b16 %v311, %v309
  %v476 = vpack.c.b16 %v312, %v310
  %v477 = vpack.c.b16 %v315, %v313
  %v478 = vpack.c.b16 %v316, %v314
  %v479 = vpack.c.b16 %v319, %v317
  %v480 = vpack.c.b16 %v320, %v318
  %v481 = vpack.c.b16 %v323, %v321
  %v482 = vpack.c.b16 %v324, %v322
  %v483 = vpack.c.b16 %v327, %v325
  %v484 = vpack.c.b16 %v328, %v326
  %v485 = vpack.c.b16 %v331, %v329
  %v486 = vpack.c.b16 %v332, %v330
  %v487 = vpack.c.b16 %v335, %v333
  %v488 = vpack.c.b16 %v336, %v334
  %v489 = vpack.c.b16 %v339, %v337
  %v490 = vpack.c.b16 %v340, %v338
  %v491 = vpack.c.b16 %v343, %v341
  %v492 = vpack.c.b16 %v344, %v342
  %v493 = vpack.c.b16 %v347, %v345
  %v494 = vpack.c.b16 %v348, %v346
  %v495 = vpack.c.b16 %v351, %v349
  %v496 = vpack.c.b16 %v352, %v350
  %v497 = vpack.c.b16 %v355, %v353
  %v498 = vpack.c.b16 %v356, %v354
  %v499 = vpack.c.b16 %v359, %v357
  %v500 = vpack.c.b16 %v360, %v358
  %v501 = vpack.c.b16 %v363, %v361
  %v502 = vpack.c.b16 %v364, %v362
  %v503 = vpack.c.b16 %v367, %v365
  %v504 = vpack.c.b16 %v368, %v366
  %v505 = vpack.c.b16 %v371, %v369
  %v506 = vpack.c.b16 %v372, %v370
  %v507 = vpack.c.b16 %v375, %v373
  %v508 = vpack.c.b16 %v376, %v374
  %v509 = vpack.c.b16 %v379, %v377
  %v510 = vpack.c.b16 %v380, %v378
  %v511 = vpack.c.b16 %v383, %v381
  %v512 = vpack.c.b16 %v384, %v382
  %v513 = vpack.c.b16 %v387, %v385
  %v514 = vpack.c.b16 %v388, %v386
  %v515 = vpack.c.b16 %v391, %v389
  %v516 = vpack.c.b16 %v392, %v390
  %v517 = vpack.c.b16 %v395, %v393
  %v518 = vpack.c.b16 %v396, %v394
  %v519 = vpack.c.b16 %v399, %v397
  %v520 = vpack.c.b16 %v400, %v398
  %v521 = vpack.c.b16 %v403, %v401
  %v522 = vpack.c.b16 %v404, %v402
  %v523 = vpack.c.b16 %v407, %v405
  %v524 = vpack.c.b16 %v408, %v406
  %v525 = vpack.c.b16 %v411, %v409
  %v526 = vpack.c.b16 %v412, %v410
  %v527 = vpack.c.b16 %v415, %v413
  %v528 = vpack.c.b16 %v416, %v414
  %v529 = vpack.c.b16 %v419, %v417
  %v530 = vpack.c.b16 %v420, %v418
  %v531 = vpack.c.b16 %v423, %v421
  %v532 = vpack.c.b16 %v424, %v422
  %v533 = vpack.c.b16 %v427, %v425
  %v534 = vpack.c.b16 %v428, %v426
  %v535 = vpack.c.b16 %v431, %v429
  %v536 = vpack.c.b16 %v432, %v430
  %v537 = vpack.c.b16 %v435, %v433
  %v538 = vpack.c.b16 %v436, %v434
  %v539 = vpack.c.b16 %v439, %v437
  %v540 = vpack.c.b16 %v440, %v438
  %v541 = vpack.c.b16 %v443, %v441
  %v542 = vpack.c.b16 %v444, %v442
  %vm641 = vcmask 130048
  %v643 = vsel %vm641, %v40, 0
  %645 = vmatprep.subr.bf16.mxu0 %v446
  %646 = vmatpush1.bf16.msra.mxu0 %v445
  %647 = vmatprep.subr.bf16.mxu0 %v448
  %648 = vmatpush1.bf16.msra.mxu0 %v447
  %649 = vmatprep.subr.bf16.mxu0 %v450
  %650 = vmatpush1.bf16.msra.mxu0 %v449
  %651 = vmatprep.subr.bf16.mxu0 %v452
  %652 = vmatpush1.bf16.msra.mxu0 %v451
  %653 = vmatprep.subr.bf16.mxu0 %v454
  %654 = vmatpush1.bf16.msra.mxu0 %v453
  %655 = vmatprep.subr.bf16.mxu0 %v456
  %656 = vmatpush1.bf16.msra.mxu0 %v455
  %657 = vmatprep.subr.bf16.mxu0 %v458
  %658 = vmatpush1.bf16.msra.mxu0 %v457
  %659 = vmatprep.subr.bf16.mxu0 %v460
  %660 = vmatpush1.bf16.msra.mxu0 %v459
  %661 = vmatprep.subr.bf16.mxu0 %v462
  %662 = vmatpush1.bf16.msra.mxu0 %v461
  %663 = vmatprep.subr.bf16.mxu0 %v464
  %664 = vmatpush1.bf16.msra.mxu0 %v463
  %665 = vmatprep.subr.bf16.mxu0 %v466
  %666 = vmatpush1.bf16.msra.mxu0 %v465
  %667 = vmatprep.subr.bf16.mxu0 %v468
  %668 = vmatpush1.bf16.msra.mxu0 %v467
  %669 = vmatprep.subr.bf16.mxu0 %v470
  %670 = vmatpush1.bf16.msra.mxu0 %v469
  %671 = vmatprep.subr.bf16.mxu0 %v472
  %672 = vmatpush1.bf16.msra.mxu0 %v471
  %673 = vmatprep.subr.bf16.mxu0 %v474
  %674 = vmatpush1.bf16.msra.mxu0 %v473
  %675 = vmatprep.subr.bf16.mxu0 %v476
  %676 = vmatpush1.bf16.msra.mxu0 %v475
  %677 = vmatprep.mubr.bf16.mxu0 %v35
  %678 = vmatmul.mubr.bf16.gmra.mrb[0].mxu0 %v34
  %v679 = vpop.f32.mrb[0].mxu0
  %v680 = vadd.f32 %v144, %v679
  %v681 = vpop.f32.mrb[0].mxu0
  %v682 = vadd.f32 %v148, %v681
  %v683 = vpop.f32.mrb[0].mxu0
  %v684 = vpop.f32.mrb[0].mxu0
  %685 = vdwg.mxu0
  %686 = vmatprep.subr.bf16.mxu0 %v478
  %687 = vmatpush1.bf16.msra.mxu0 %v477
  %688 = vmatprep.subr.bf16.mxu0 %v480
  %689 = vmatpush1.bf16.msra.mxu0 %v479
  %690 = vmatprep.subr.bf16.mxu0 %v482
  %691 = vmatpush1.bf16.msra.mxu0 %v481
  %692 = vmatprep.subr.bf16.mxu0 %v484
  %693 = vmatpush1.bf16.msra.mxu0 %v483
  %694 = vmatprep.subr.bf16.mxu0 %v486
  %695 = vmatpush1.bf16.msra.mxu0 %v485
  %696 = vmatprep.subr.bf16.mxu0 %v488
  %697 = vmatpush1.bf16.msra.mxu0 %v487
  %698 = vmatprep.subr.bf16.mxu0 %v490
  %699 = vmatpush1.bf16.msra.mxu0 %v489
  %700 = vmatprep.subr.bf16.mxu0 %v492
  %701 = vmatpush1.bf16.msra.mxu0 %v491
  %702 = vmatprep.subr.bf16.mxu0 %v494
  %703 = vmatpush1.bf16.msra.mxu0 %v493
  %704 = vmatprep.subr.bf16.mxu0 %v496
  %705 = vmatpush1.bf16.msra.mxu0 %v495
  %706 = vmatprep.subr.bf16.mxu0 %v498
  %707 = vmatpush1.bf16.msra.mxu0 %v497
  %708 = vmatprep.subr.bf16.mxu0 %v500
  %709 = vmatpush1.bf16.msra.mxu0 %v499
  %710 = vmatprep.subr.bf16.mxu0 %v502
  %711 = vmatpush1.bf16.msra.mxu0 %v501
  %712 = vmatprep.subr.bf16.mxu0 %v504
  %713 = vmatpush1.bf16.msra.mxu0 %v503
  %714 = vmatprep.subr.bf16.mxu0 %v506
  %715 = vmatpush1.bf16.msra.mxu0 %v505
  %716 = vmatprep.subr.bf16.mxu0 %v508
  %717 = vmatpush1.bf16.msra.mxu0 %v507
  %718 = vmatprep.mubr.bf16.mxu0 %v37
  %719 = vmatmul.mubr.bf16.gmra.mrb[0].mxu0 %v36
  %v720 = vpop.f32.mrb[0].mxu0
  %v721 = vadd.f32 %v680, %v720
  %v722 = vpop.f32.mrb[0].mxu0
  %v723 = vadd.f32 %v682, %v722
  %v724 = vpop.f32.mrb[0].mxu0
  %v725 = vpop.f32.mrb[0].mxu0
  %726 = vdwg.mxu0
  %727 = vmatprep.subr.bf16.mxu0 %v510
  %728 = vmatpush1.bf16.msra.mxu0 %v509
  %729 = vmatprep.subr.bf16.mxu0 %v512
  %730 = vmatpush1.bf16.msra.mxu0 %v511
  %731 = vmatprep.subr.bf16.mxu0 %v514
  %732 = vmatpush1.bf16.msra.mxu0 %v513
  %733 = vmatprep.subr.bf16.mxu0 %v516
  %734 = vmatpush1.bf16.msra.mxu0 %v515
  %735 = vmatprep.subr.bf16.mxu0 %v518
  %736 = vmatpush1.bf16.msra.mxu0 %v517
  %737 = vmatprep.subr.bf16.mxu0 %v520
  %738 = vmatpush1.bf16.msra.mxu0 %v519
  %739 = vmatprep.subr.bf16.mxu0 %v522
  %740 = vmatpush1.bf16.msra.mxu0 %v521
  %741 = vmatprep.subr.bf16.mxu0 %v524
  %742 = vmatpush1.bf16.msra.mxu0 %v523
  %743 = vmatprep.subr.bf16.mxu0 %v526
  %744 = vmatpush1.bf16.msra.mxu0 %v525
  %745 = vmatprep.subr.bf16.mxu0 %v528
  %746 = vmatpush1.bf16.msra.mxu0 %v527
  %747 = vmatprep.subr.bf16.mxu0 %v530
  %748 = vmatpush1.bf16.msra.mxu0 %v529
  %749 = vmatprep.subr.bf16.mxu0 %v532
  %750 = vmatpush1.bf16.msra.mxu0 %v531
  %751 = vmatprep.subr.bf16.mxu0 %v534
  %752 = vmatpush1.bf16.msra.mxu0 %v533
  %753 = vmatprep.subr.bf16.mxu0 %v536
  %754 = vmatpush1.bf16.msra.mxu0 %v535
  %755 = vmatprep.subr.bf16.mxu0 %v538
  %756 = vmatpush1.bf16.msra.mxu0 %v537
  %757 = vmatprep.subr.bf16.mxu0 %v540
  %758 = vmatpush1.bf16.msra.mxu0 %v539
  %759 = vmatprep.mubr.bf16.mxu0 %v39
  %760 = vmatmul.mubr.bf16.gmra.mrb[0].mxu0 %v38
  %v761 = vpop.f32.mrb[0].mxu0
  %v762 = vadd.f32 %v721, %v761
  %v763 = vpop.f32.mrb[0].mxu0
  %v764 = vadd.f32 %v723, %v763
  %v765 = vpop.f32.mrb[0].mxu0
  %v766 = vpop.f32.mrb[0].mxu0
  %767 = vdwg.mxu0
  %768 = vmatprep.subr.bf16.mxu0 %v542
  %769 = vmatpush1.bf16.msra.mxu0 %v541
  %770 = vmatprep.subr.bf16.mxu0 0
  %771 = vmatpush1.bf16.msra.mxu0 0
  %772 = vmatprep.subr.bf16.mxu0 0
  %773 = vmatpush1.bf16.msra.mxu0 0
  %774 = vmatprep.subr.bf16.mxu0 0
  %775 = vmatpush1.bf16.msra.mxu0 0
  %776 = vmatprep.subr.bf16.mxu0 0
  %777 = vmatpush1.bf16.msra.mxu0 0
  %778 = vmatprep.subr.bf16.mxu0 0
  %779 = vmatpush1.bf16.msra.mxu0 0
  %780 = vmatprep.subr.bf16.mxu0 0
  %781 = vmatpush1.bf16.msra.mxu0 0
  %782 = vmatprep.subr.bf16.mxu0 0
  %783 = vmatpush1.bf16.msra.mxu0 0
  %784 = vmatprep.subr.bf16.mxu0 0
  %785 = vmatpush1.bf16.msra.mxu0 0
  %786 = vmatprep.subr.bf16.mxu0 0
  %787 = vmatpush1.bf16.msra.mxu0 0
  %788 = vmatprep.subr.bf16.mxu0 0
  %789 = vmatpush1.bf16.msra.mxu0 0
  %790 = vmatprep.subr.bf16.mxu0 0
  %791 = vmatpush1.bf16.msra.mxu0 0
  %792 = vmatprep.subr.bf16.mxu0 0
  %793 = vmatpush1.bf16.msra.mxu0 0
  %794 = vmatprep.subr.bf16.mxu0 0
  %795 = vmatpush1.bf16.msra.mxu0 0
  %796 = vmatprep.subr.bf16.mxu0 0
  %797 = vmatpush1.bf16.msra.mxu0 0
  %798 = vmatprep.subr.bf16.mxu0 0
  %799 = vmatpush1.bf16.msra.mxu0 0
  %800 = vmatprep.mubr.bf16.mxu0 0
  %801 = vmatmul.mubr.bf16.gmra.mrb[0].mxu0 %v643
  %v802 = vpop.f32.mrb[0].mxu0
  %v803 = vadd.f32 %v762, %v802
  %v804 = vpop.f32.mrb[0].mxu0
  %v805 = vadd.f32 %v764, %v804
  %v806 = vpop.f32.mrb[0].mxu0
  %v807 = vpop.f32.mrb[0].mxu0
  %808 = vdwg.mxu0
  %v809 = vmax.f32 %v803, 0.0
  %v810 = vmax.f32 %v805, 0.0
  %v811 = vpack.c.bf16 %v809, %v809
  %v812 = vpack.c.bf16 %v810, %v810
  %v813 = vld [vmem:[%s3] sm:$0xf]
  %v814 = vld [vmem:[%s3 + $0x4] sm:$0xf]
  %v815 = vld [vmem:[%s3 + $0x8] sm:$0xf]
  %v816 = vld [vmem:[%s3 + $0xc] sm:$0xf]
  %v817 = vld [vmem:[%s3 + $0x10] sm:$0xf]
  %v818 = vld [vmem:[%s3 + $0x14] sm:$0xf]
  %v819 = vld [vmem:[%s3 + $0x18] sm:$0xf]
  %v820 = vld [vmem:[%s3 + $0x1c] sm:$0xf]
  %v821 = vld [vmem:[%s3 + $0x20] sm:$0xf]
  %v822 = vld [vmem:[%s3 + $0x24] sm:$0xf]
  %v823 = vld [vmem:[%s3 + $0x28] sm:$0xf]
  %v824 = vld [vmem:[%s3 + $0x2c] sm:$0xf]
  %v825 = vld [vmem:[%s3 + $0x30] sm:$0xf]
  %v826 = vld [vmem:[%s3 + $0x34] sm:$0xf]
  %v827 = vld [vmem:[%s3 + $0x38] sm:$0xf]
  %v828 = vld [vmem:[%s3 + $0x3c] sm:$0xf]
  %v829 = vld [vmem:[%s3 + $0x40] sm:$0xf]
  %v830 = vld [vmem:[%s3 + $0x44] sm:$0xf]
  %v831 = vld [vmem:[%s3 + $0x48] sm:$0xf]
  %v832 = vld [vmem:[%s3 + $0x4c] sm:$0xf]
  %v833 = vld [vmem:[%s3 + $0x50] sm:$0xf]
  %v834 = vld [vmem:[%s3 + $0x54] sm:$0xf]
  %v835 = vld [vmem:[%s3 + $0x58] sm:$0xf]
  %v836 = vld [vmem:[%s3 + $0x5c] sm:$0xf]
  %v837 = vld [vmem:[%s3 + $0x60] sm:$0xf]
  %v838 = vld [vmem:[%s3 + $0x64] sm:$0xf]
  %v839 = vld [vmem:[%s3 + $0x68] sm:$0xf]
  %v840 = vld [vmem:[%s3 + $0x6c] sm:$0xf]
  %v841 = vld [vmem:[%s3 + $0x70] sm:$0xf]
  %v842 = vld [vmem:[%s3 + $0x74] sm:$0xf]
  %v843 = vld [vmem:[%s3 + $0x78] sm:$0xf]
  %v844 = vld [vmem:[%s3 + $0x7c] sm:$0xf]
  %v845 = vld [vmem:[%s4] sm:$0x1]
  %v847 = vlaneseq
  %v848 = vshrl.u32 %v847, 7
  %v849 = vsub.s32 0, %v848
  %v850 = vrot.slane %v845, %v849
  %v884 = vunpack.c.l.b16 %v813
  %v885 = vunpack.c.l.b16 %v814
  %v886 = vunpack.c.l.b16 %v815
  %v887 = vunpack.c.l.b16 %v816
  %v888 = vunpack.c.l.b16 %v817
  %v889 = vunpack.c.l.b16 %v818
  %v890 = vunpack.c.l.b16 %v819
  %v891 = vunpack.c.l.b16 %v820
  %v892 = vunpack.c.l.b16 %v821
  %v893 = vunpack.c.l.b16 %v822
  %v894 = vunpack.c.l.b16 %v823
  %v895 = vunpack.c.l.b16 %v824
  %v896 = vunpack.c.l.b16 %v825
  %v897 = vunpack.c.l.b16 %v826
  %v898 = vunpack.c.l.b16 %v827
  %v899 = vunpack.c.l.b16 %v828
  %v900 = vunpack.c.l.b16 %v829
  %v901 = vunpack.c.l.b16 %v830
  %v902 = vunpack.c.l.b16 %v831
  %v903 = vunpack.c.l.b16 %v832
  %v904 = vunpack.c.l.b16 %v833
  %v905 = vunpack.c.l.b16 %v834
  %v906 = vunpack.c.l.b16 %v835
  %v907 = vunpack.c.l.b16 %v836
  %v908 = vunpack.c.l.b16 %v837
  %v909 = vunpack.c.l.b16 %v838
  %v910 = vunpack.c.l.b16 %v839
  %v911 = vunpack.c.l.b16 %v840
  %v912 = vunpack.c.l.b16 %v841
  %v913 = vunpack.c.l.b16 %v842
  %v914 = vunpack.c.l.b16 %v843
  %v915 = vunpack.c.l.b16 %v844
  %v916 = vpack.c.b16 %v885, %v884
  %v917 = vpack.c.b16 %v887, %v886
  %v918 = vpack.c.b16 %v889, %v888
  %v919 = vpack.c.b16 %v891, %v890
  %v920 = vpack.c.b16 %v893, %v892
  %v921 = vpack.c.b16 %v895, %v894
  %v922 = vpack.c.b16 %v897, %v896
  %v923 = vpack.c.b16 %v899, %v898
  %v924 = vpack.c.b16 %v901, %v900
  %v925 = vpack.c.b16 %v903, %v902
  %v926 = vpack.c.b16 %v905, %v904
  %v927 = vpack.c.b16 %v907, %v906
  %v928 = vpack.c.b16 %v909, %v908
  %v929 = vpack.c.b16 %v911, %v910
  %v930 = vpack.c.b16 %v913, %v912
  %v931 = vpack.c.b16 %v915, %v914
  %948 = vmatprep.subr.bf16.mxu0 0
  %949 = vmatpush1.bf16.msra.mxu0 %v916
  %950 = vmatprep.subr.bf16.mxu0 0
  %951 = vmatpush1.bf16.msra.mxu0 %v917
  %952 = vmatprep.subr.bf16.mxu0 0
  %953 = vmatpush1.bf16.msra.mxu0 %v918
  %954 = vmatprep.subr.bf16.mxu0 0
  %955 = vmatpush1.bf16.msra.mxu0 %v919
  %956 = vmatprep.subr.bf16.mxu0 0
  %957 = vmatpush1.bf16.msra.mxu0 %v920
  %958 = vmatprep.subr.bf16.mxu0 0
  %959 = vmatpush1.bf16.msra.mxu0 %v921
  %960 = vmatprep.subr.bf16.mxu0 0
  %961 = vmatpush1.bf16.msra.mxu0 %v922
  %962 = vmatprep.subr.bf16.mxu0 0
  %963 = vmatpush1.bf16.msra.mxu0 %v923
  %964 = vmatprep.subr.bf16.mxu0 0
  %965 = vmatpush1.bf16.msra.mxu0 %v924
  %966 = vmatprep.subr.bf16.mxu0 0
  %967 = vmatpush1.bf16.msra.mxu0 %v925
  %968 = vmatprep.subr.bf16.mxu0 0
  %969 = vmatpush1.bf16.msra.mxu0 %v926
  %970 = vmatprep.subr.bf16.mxu0 0
  %971 = vmatpush1.bf16.msra.mxu0 %v927
  %972 = vmatprep.subr.bf16.mxu0 0
  %973 = vmatpush1.bf16.msra.mxu0 %v928
  %974 = vmatprep.subr.bf16.mxu0 0
  %975 = vmatpush1.bf16.msra.mxu0 %v929
  %976 = vmatprep.subr.bf16.mxu0 0
  %977 = vmatpush1.bf16.msra.mxu0 %v930
  %978 = vmatprep.subr.bf16.mxu0 0
  %979 = vmatpush1.bf16.msra.mxu0 %v931
  %980 = vmatprep.mubr.bf16.mxu0 %v812
  %981 = vmatmul.mubr.bf16.gmra.mrb[0].mxu0 %v811
  %v982 = vpop.f32.mrb[0].mxu0
  %v983 = vadd.f32 %v850, %v982
  %v984 = vpop.f32.mrb[0].mxu0
  %v985 = vpop.f32.mrb[0].mxu0
  %v986 = vpop.f32.mrb[0].mxu0
  %987 = vdwg.mxu0
  %v988 = vmax.f32 %v983, 0.0
  %v989 = vpack.c.bf16 %v988, %v988
  %v990 = vld [vmem:[%s5] sm:$0xf]
  %v991 = vld [vmem:[%s5 + $0x4] sm:$0xf]
  %v992 = vld [vmem:[%s5 + $0x8] sm:$0xf]
  %v993 = vld [vmem:[%s5 + $0xc] sm:$0xf]
  %v994 = vld [vmem:[%s5 + $0x10] sm:$0xf]
  %v995 = vld [vmem:[%s5 + $0x14] sm:$0xf]
  %v996 = vld [vmem:[%s5 + $0x18] sm:$0xf]
  %v997 = vld [vmem:[%s5 + $0x1c] sm:$0xf]
  %v998 = vld [vmem:[%s6] sm:$0x1]
  %v1000 = vlaneseq
  %v1001 = vshrl.u32 %v1000, 7
  %v1002 = vsub.s32 0, %v1001
  %v1003 = vrot.slane %v998, %v1002
  %v1013 = vunpack.c.l.b16 %v990
  %v1014 = vunpack.c.l.b16 %v991
  %v1015 = vunpack.c.l.b16 %v992
  %v1016 = vunpack.c.l.b16 %v993
  %v1017 = vunpack.c.l.b16 %v994
  %v1018 = vunpack.c.l.b16 %v995
  %v1019 = vunpack.c.l.b16 %v996
  %v1020 = vunpack.c.l.b16 %v997
  %v1021 = vpack.c.b16 %v1014, %v1013
  %v1022 = vpack.c.b16 %v1016, %v1015
  %v1023 = vpack.c.b16 %v1018, %v1017
  %v1024 = vpack.c.b16 %v1020, %v1019
  %vm1029 = vcmask 523264
  %v1031 = vsel %vm1029, %v989, 0
  %1033 = vmatprep.subr.bf16.mxu0 0
  %1034 = vmatpush1.bf16.msra.mxu0 %v1021
  %1035 = vmatprep.subr.bf16.mxu0 0
  %1036 = vmatpush1.bf16.msra.mxu0 %v1022
  %1037 = vmatprep.subr.bf16.mxu0 0
  %1038 = vmatpush1.bf16.msra.mxu0 %v1023
  %1039 = vmatprep.subr.bf16.mxu0 0
  %1040 = vmatpush1.bf16.msra.mxu0 %v1024
  %1041 = vmatprep.subr.bf16.mxu0 0
  %1042 = vmatpush1.bf16.msra.mxu0 0
  %1043 = vmatprep.subr.bf16.mxu0 0
  %1044 = vmatpush1.bf16.msra.mxu0 0
  %1045 = vmatprep.subr.bf16.mxu0 0
  %1046 = vmatpush1.bf16.msra.mxu0 0
  %1047 = vmatprep.subr.bf16.mxu0 0
  %1048 = vmatpush1.bf16.msra.mxu0 0
  %1049 = vmatprep.subr.bf16.mxu0 0
  %1050 = vmatpush1.bf16.msra.mxu0 0
  %1051 = vmatprep.subr.bf16.mxu0 0
  %1052 = vmatpush1.bf16.msra.mxu0 0
  %1053 = vmatprep.subr.bf16.mxu0 0
  %1054 = vmatpush1.bf16.msra.mxu0 0
  %1055 = vmatprep.subr.bf16.mxu0 0
  %1056 = vmatpush1.bf16.msra.mxu0 0
  %1057 = vmatprep.subr.bf16.mxu0 0
  %1058 = vmatpush1.bf16.msra.mxu0 0
  %1059 = vmatprep.subr.bf16.mxu0 0
  %1060 = vmatpush1.bf16.msra.mxu0 0
  %1061 = vmatprep.subr.bf16.mxu0 0
  %1062 = vmatpush1.bf16.msra.mxu0 0
  %1063 = vmatprep.subr.bf16.mxu0 0
  %1064 = vmatpush1.bf16.msra.mxu0 0
  %1065 = vmatprep.mubr.bf16.mxu0 0
  %1066 = vmatmul.mubr.bf16.gmra.mrb[0].mxu0 %v1031
  %v1067 = vpop.f32.mrb[0].mxu0
  %v1068 = vadd.f32 %v1003, %v1067
  %v1069 = vpop.f32.mrb[0].mxu0
  %v1070 = vpop.f32.mrb[0].mxu0
  %v1071 = vpop.f32.mrb[0].mxu0
  %1072 = vdwg.mxu0
  %v1073 = vmax.f32 %v1068, 0.0
  %v1074 = vlaneseq
  %v1075 = vand.u32 %v1074, 127
  %vm1076 = vcmp.lt.s32.totalorder %v1075, 10
  %v1077 = vsel %vm1076, %v1073, -1e+30
  %1078 = vmax.xlane.f32.xlu0 %v1077
  %v1079 = vpop.xlane.xlu0 %1078
  %v1080 = vsub.f32 %v1077, %v1079
  %v1081 = vmul.f32 %v1080, 1.442695
  %v1082 = vpow.pop %v1081
  %1083 = vadd.xlane.f32.xlu0 %v1082
  %v1084 = vpop.xlane.xlu0 %1083
  %v1085 = vlog2.pop %v1084
  %v1086 = vmul.f32 %v1085, 0.6931472
  %v1087 = vsub.f32 %v1080, %v1086
  %v1088 = vpack.c.bf16 %v1087, %v1087
  %1089 = vst [vmem:[%s7] sm:$0xf] %v1088
  // Predicated region
  $region30: #{feedforward.1} parent=0 // pred_check
    _
  $region31: #{feedforward.1} parent=0 // pred_check_branch
    %1091 = sbr.rel (0) target = $region33
  $region32: #{feedforward.1} parent=0 // pred_region
    _
  $region33: #{feedforward.1} parent=0 // pred_fallthru
    _
  // Predicated region
  $region34: #{feedforward.1} parent=0 // pred_check
    _
  $region35: #{feedforward.1} parent=0 // pred_check_branch
    %1093 = sbr.rel (0) target = $region37
  $region36: #{feedforward.1} parent=0 // pred_region
    _
  $region37: #{feedforward.1} parent=0 // pred_fallthru
    _

</llo_original>
